<compile_context>
chip_gen: v7x
topology: tpu7x:2x2x1
jax: 0.10.0
libtpu: 0.0.40
codegen_flags: <defaults>
</compile_context>

<pallas_src>
import jax
import jax.numpy as jnp
from jax import lax
from jax.experimental import pallas as pl
from jax.experimental.pallas import tpu as pltpu


# ----------------------------- Pallas kernel --------------------------------

def _basic_block_kernel(x_ref, w1_ref, w2_ref, b1_ref, b2_ref, o_ref):
    """One batch-tile per grid step, channels-first, batch folded into sublanes.

    x_ref : (R, L)   R = NB*C rows (row index = n*C + c), L on lanes, f32
    w1_ref: (R, 3*R) bf16 block-diagonal conv1 weight (BN1 scale folded in)
    w2_ref: (R, 3*R) bf16 block-diagonal conv2 weight (BN2 scale folded in)
    b1_ref, b2_ref: (R, 1) f32 folded BatchNorm biases
    o_ref : (R, L)   f32
    """
    x = x_ref[...]                                    # (R, L) f32
    R, L = x.shape

    # Edge masks for the zero padding (pad=1); hoisted, shared by both convs.
    lane = lax.broadcasted_iota(jnp.int32, (R, L), 1)
    left_edge = lane == 0                             # kills x[l-1] at l == 0
    right_edge = lane == L - 1                        # kills x[l+1] at l == L-1

    def conv3(inp, w_ref):
        # Shifted taps via lane rotation (XLU); rolls never cross rows, so the
        # batch-folded layout stays exact.
        xm1 = jnp.where(left_edge, 0.0, pltpu.roll(inp, shift=1, axis=1))
        xp1 = jnp.where(right_edge, 0.0, pltpu.roll(inp, shift=L - 1, axis=1))
        s = jnp.concatenate([xm1, inp, xp1], axis=0).astype(jnp.bfloat16)  # (3R, L)
        # Single MXU matmul per conv layer; f32 accumulate.
        return jnp.dot(w_ref[...], s, preferred_element_type=jnp.float32)  # (R, L)

    # conv1 (BN1 scale pre-folded) -> +bias -> relu
    h = jnp.maximum(conv3(x, w1_ref) + b1_ref[...], 0.0)
    # conv2 (BN2 scale pre-folded) -> +bias
    h = conv3(h, w2_ref) + b2_ref[...]
    # residual add + relu  (stride=1, downsample=None => residual = x)
    # TODO(synk): stride>1 / downsample path of the PyTorch module not implemented
    o_ref[...] = jnp.maximum(h + x, 0.0)


# ------------------------------ wrapper --------------------------------------

def _pick_batch_tile(N, C, L):
    """Batch-tile NB: divides N, NB*C is 8-aligned (or full), NB*C <= 128 so the
    block-diagonal weight stays within one MXU pass, and the per-step input slab
    stays small."""
    aligned = [nb for nb in range(1, N + 1)
               if N % nb == 0 and (((nb * C) % 8 == 0) or nb == N)]
    small = [nb for nb in aligned
             if nb * C <= 128 and nb * C * L * 4 <= (2 << 20)]
    if small:
        return max(small)
    return min(aligned)          # nb == N always present -> never empty


def basic_block_3x3_fft(x_ncl, w1, w2, bn1, bn2, *, eps=1e-5):
    """x_ncl: (N, C, L) float32, PyTorch NCL layout (used natively, no transpose).
    w1: (Cout, Cin, 3), w2: (Cout, Cout, 3) PyTorch Conv1d weights.
    bn1/bn2: dict with gamma, beta, mean, var (shape (Cout,))."""
    N, Cin, L = x_ncl.shape
    Cout = w1.shape[0]
    assert Cin == Cout, "residual add requires inplanes == planes (no downsample)"
    C = Cout

    x_ncl = x_ncl.astype(jnp.float32)
    nb = _pick_batch_tile(N, C, L)
    R = nb * C

    # Free view: (N, C, L) -> (N*C, L); row index = n*C + c.
    x2d = x_ncl.reshape(N * C, L)

    # Fold BN scale into the conv weights (conv is linear in W), keep only bias.
    # Build the batch-block-diagonal, tap-stacked weight matching the in-kernel
    # sublane stack [x_{l-1}; x_l; x_{l+1}]  (PyTorch tap k pairs with x[l+k-1]).
    def fold(w, bn):
        scale = bn["gamma"] / jnp.sqrt(bn["var"] + eps)            # (Cout,)
        bias = bn["beta"] - bn["mean"] * scale                     # (Cout,)
        ws = (w * scale[:, None, None]).astype(jnp.float32)        # (Cout, Cin, 3)
        eye = jnp.eye(nb, dtype=jnp.float32)
        taps = [jnp.kron(eye, ws[:, :, k]) for k in range(3)]      # (R, R) each
        w_full = jnp.concatenate(taps, axis=1).astype(jnp.bfloat16)  # (R, 3R)
        b_full = jnp.tile(bias.astype(jnp.float32), (nb,)).reshape(R, 1)
        return w_full, b_full

    w1_f, b1 = fold(w1, bn1)
    w2_f, b2 = fold(w2, bn2)

    out2d = pl.pallas_call(
        _basic_block_kernel,
        out_shape=jax.ShapeDtypeStruct((N * C, L), jnp.float32),
        grid_spec=pltpu.PrefetchScalarGridSpec(
            num_scalar_prefetch=0,
            grid=(N // nb,),
            in_specs=[
                pl.BlockSpec((R, L), lambda i: (i, 0)),
                pl.BlockSpec((R, 3 * R), lambda i: (0, 0)),
                pl.BlockSpec((R, 3 * R), lambda i: (0, 0)),
                pl.BlockSpec((R, 1), lambda i: (0, 0)),
                pl.BlockSpec((R, 1), lambda i: (0, 0)),
            ],
            out_specs=pl.BlockSpec((R, L), lambda i: (i, 0)),
        ),
        compiler_params=pltpu.CompilerParams(
            dimension_semantics=("parallel",)),
    )(x2d, w1_f, w2_f, b1, b2)

    return out2d.reshape(N, C, L)


# ----------------------------- pure-JAX reference ----------------------------

def _reference(x_ncl, w1, w2, bn1, bn2, eps=1e-5):
    def conv(x, w):
        return lax.conv_general_dilated(
            x, w, window_strides=(1,), padding=[(1, 1)],
            dimension_numbers=("NCH", "OIH", "NCH"))

    def bn(x, p):
        scale = p["gamma"] / jnp.sqrt(p["var"] + eps)
        bias = p["beta"] - p["mean"] * scale
        return x * scale[None, :, None] + bias[None, :, None]

    out = jax.nn.relu(bn(conv(x_ncl, w1), bn1))
    out = bn(conv(out, w2), bn2)
    return jax.nn.relu(out + x_ncl)


# ----------------------------------- main ------------------------------------

if __name__ == "__main__":
    # inplanes3_fft == planes == 8 (required by the residual add); L=256 so the
    # lane axis is fully dense (>=128 wide).
    N, C, L = 2, 8, 256

    key = jax.random.PRNGKey(0)
    k = jax.random.split(key, 8)

    x = jax.random.normal(k[0], (N, C, L), jnp.float32)

    w1 = 0.1 * jax.random.normal(k[1], (C, C, 3), jnp.float32)
    w2 = 0.1 * jax.random.normal(k[2], (C, C, 3), jnp.float32)

    bn1 = dict(gamma=1.0 + 0.1 * jax.random.normal(k[3], (C,), jnp.float32),
               beta=0.1 * jax.random.normal(k[4], (C,), jnp.float32),
               mean=0.05 * jax.random.normal(k[5], (C,), jnp.float32),
               var=jnp.abs(1.0 + 0.1 * jax.random.normal(k[6], (C,), jnp.float32)))
    bn2 = dict(gamma=jnp.ones((C,), jnp.float32),
               beta=jnp.zeros((C,), jnp.float32),
               mean=jnp.zeros((C,), jnp.float32),
               var=jnp.abs(1.0 + 0.1 * jax.random.normal(k[7], (C,), jnp.float32)))

    out = basic_block_3x3_fft(x, w1, w2, bn1, bn2)
    out = jax.block_until_ready(out)

    ref = _reference(x, w1, w2, bn1, bn2)
    assert out.shape == (N, C, L)
    # bf16 MXU operands (f32 accumulate / epilogue) => looser tolerance than f32.
    assert jnp.allclose(out, ref, atol=5e-2, rtol=5e-2), "mismatch vs reference"

    print("KERNEL_OK")
</pallas_src>

<mosaic_0001>
module attributes {stable_mosaic.version = 11 : i64} {
  func.func @_basic_block_kernel(%arg0: i32, %arg1: memref<16x256xf32, #tpu.memory_space<vmem>>, %arg2: memref<16x48xbf16, #tpu.memory_space<vmem>>, %arg3: memref<16x48xbf16, #tpu.memory_space<vmem>>, %arg4: memref<16x1xf32, #tpu.memory_space<vmem>>, %arg5: memref<16x1xf32, #tpu.memory_space<vmem>>, %arg6: memref<16x256xf32, #tpu.memory_space<vmem>>) attributes {dimension_semantics = [#tpu.dimension_semantics<parallel>], iteration_bounds = array<i64: 1>, scalar_prefetch = 0 : i64, scratch_operands = 0 : i64, tpu.core_type = #tpu.core_type<tc>, window_params = [{transform_indices = @transform_0, window_bounds = array<i64: 16, 256>}, {pipeline_mode = #tpu.pipeline_mode<synchronous>, transform_indices = @transform_1, window_bounds = array<i64: 16, 48>}, {pipeline_mode = #tpu.pipeline_mode<synchronous>, transform_indices = @transform_2, window_bounds = array<i64: 16, 48>}, {pipeline_mode = #tpu.pipeline_mode<synchronous>, transform_indices = @transform_3, window_bounds = array<i64: 16, 1>}, {pipeline_mode = #tpu.pipeline_mode<synchronous>, transform_indices = @transform_4, window_bounds = array<i64: 16, 1>}, {transform_indices = @transform_5, window_bounds = array<i64: 16, 256>}]} {
    %c0 = arith.constant 0 : index
    %c0_0 = arith.constant 0 : index
    %0 = vector.load %arg1[%c0, %c0_0] : memref<16x256xf32, #tpu.memory_space<vmem>>, vector<16x256xf32>
    %1 = tpu.iota {dimensions = array<i32: 1>} : vector<16x256xi32>
    %c0_i32 = arith.constant 0 : i32
    %2 = vector.broadcast %c0_i32 : i32 to vector<16x256xi32>
    %3 = arith.cmpi eq, %1, %2 : vector<16x256xi32>
    %c255_i32 = arith.constant 255 : i32
    %4 = vector.broadcast %c255_i32 : i32 to vector<16x256xi32>
    %5 = arith.cmpi eq, %1, %4 : vector<16x256xi32>
    %c1_i32 = arith.constant 1 : i32
    %6 = tpu.dynamic_rotate %0 by %c1_i32 dim 1 : vector<16x256xf32>, i32 -> vector<16x256xf32>
    %cst = arith.constant 0.000000e+00 : f32
    %7 = vector.broadcast %cst : f32 to vector<16x256xf32>
    %8 = arith.select %3, %7, %6 : vector<16x256xi1>, vector<16x256xf32>
    %c255_i32_1 = arith.constant 255 : i32
    %9 = tpu.dynamic_rotate %0 by %c255_i32_1 dim 1 : vector<16x256xf32>, i32 -> vector<16x256xf32>
    %cst_2 = arith.constant 0.000000e+00 : f32
    %10 = vector.broadcast %cst_2 : f32 to vector<16x256xf32>
    %11 = arith.select %5, %10, %9 : vector<16x256xi1>, vector<16x256xf32>
    %12 = tpu.concatenate %8, %0, %11 in 0 : vector<16x256xf32>, vector<16x256xf32>, vector<16x256xf32> -> vector<48x256xf32>
    %13 = arith.truncf %12 : vector<48x256xf32> to vector<48x256xbf16>
    %c0_3 = arith.constant 0 : index
    %c0_4 = arith.constant 0 : index
    %14 = vector.load %arg2[%c0_3, %c0_4] : memref<16x48xbf16, #tpu.memory_space<vmem>>, vector<16x48xbf16>
    %cst_5 = arith.constant dense<0.000000e+00> : vector<16x256xf32>
    %15 = tpu.matmul %14, %13, %cst_5 {dimension_numbers = #tpu.dot_dimension_numbers<[1], [0], [0], [1], [0, 0, 1, 1], [], []>} : vector<16x48xbf16>, vector<48x256xbf16>, vector<16x256xf32> -> vector<16x256xf32>
    %c0_6 = arith.constant 0 : index
    %c0_7 = arith.constant 0 : index
    %16 = vector.load %arg4[%c0_6, %c0_7] : memref<16x1xf32, #tpu.memory_space<vmem>>, vector<16x1xf32>
    %17 = vector.broadcast %16 : vector<16x1xf32> to vector<16x256xf32>
    %18 = arith.addf %15, %17 : vector<16x256xf32>
    %cst_8 = arith.constant 0.000000e+00 : f32
    %19 = vector.broadcast %cst_8 : f32 to vector<16x256xf32>
    %20 = arith.maximumf %18, %19 : vector<16x256xf32>
    %c1_i32_9 = arith.constant 1 : i32
    %21 = tpu.dynamic_rotate %20 by %c1_i32_9 dim 1 : vector<16x256xf32>, i32 -> vector<16x256xf32>
    %cst_10 = arith.constant 0.000000e+00 : f32
    %22 = vector.broadcast %cst_10 : f32 to vector<16x256xf32>
    %23 = arith.select %3, %22, %21 : vector<16x256xi1>, vector<16x256xf32>
    %c255_i32_11 = arith.constant 255 : i32
    %24 = tpu.dynamic_rotate %20 by %c255_i32_11 dim 1 : vector<16x256xf32>, i32 -> vector<16x256xf32>
    %cst_12 = arith.constant 0.000000e+00 : f32
    %25 = vector.broadcast %cst_12 : f32 to vector<16x256xf32>
    %26 = arith.select %5, %25, %24 : vector<16x256xi1>, vector<16x256xf32>
    %27 = tpu.concatenate %23, %20, %26 in 0 : vector<16x256xf32>, vector<16x256xf32>, vector<16x256xf32> -> vector<48x256xf32>
    %28 = arith.truncf %27 : vector<48x256xf32> to vector<48x256xbf16>
    %c0_13 = arith.constant 0 : index
    %c0_14 = arith.constant 0 : index
    %29 = vector.load %arg3[%c0_13, %c0_14] : memref<16x48xbf16, #tpu.memory_space<vmem>>, vector<16x48xbf16>
    %cst_15 = arith.constant dense<0.000000e+00> : vector<16x256xf32>
    %30 = tpu.matmul %29, %28, %cst_15 {dimension_numbers = #tpu.dot_dimension_numbers<[1], [0], [0], [1], [0, 0, 1, 1], [], []>} : vector<16x48xbf16>, vector<48x256xbf16>, vector<16x256xf32> -> vector<16x256xf32>
    %c0_16 = arith.constant 0 : index
    %c0_17 = arith.constant 0 : index
    %31 = vector.load %arg5[%c0_16, %c0_17] : memref<16x1xf32, #tpu.memory_space<vmem>>, vector<16x1xf32>
    %32 = vector.broadcast %31 : vector<16x1xf32> to vector<16x256xf32>
    %33 = arith.addf %30, %32 : vector<16x256xf32>
    %34 = arith.addf %33, %0 : vector<16x256xf32>
    %cst_18 = arith.constant 0.000000e+00 : f32
    %35 = vector.broadcast %cst_18 : f32 to vector<16x256xf32>
    %36 = arith.maximumf %34, %35 : vector<16x256xf32>
    %c0_19 = arith.constant 0 : index
    %c0_20 = arith.constant 0 : index
    %37 = vector.load %arg6[%c0_19, %c0_20] : memref<16x256xf32, #tpu.memory_space<vmem>>, vector<16x256xf32>
    tpu.vector_store %arg6[%c0_19, %c0_20], %36 {strides = array<i32>} : memref<16x256xf32, #tpu.memory_space<vmem>>, vector<16x256xf32>,
    return
  }
  func.func @transform_0(%arg0: i32) -> (i32, i32) {
    %c0_i32 = arith.constant 0 : i32
    %c0_i32_0 = arith.constant 0 : i32
    return %arg0, %c0_i32 : i32, i32
  }
  func.func @transform_1(%arg0: i32) -> (i32, i32) {
    %c0_i32 = arith.constant 0 : i32
    %c0_i32_0 = arith.constant 0 : i32
    %c0_i32_1 = arith.constant 0 : i32
    return %c0_i32, %c0_i32_0 : i32, i32
  }
  func.func @transform_2(%arg0: i32) -> (i32, i32) {
    %c0_i32 = arith.constant 0 : i32
    %c0_i32_0 = arith.constant 0 : i32
    %c0_i32_1 = arith.constant 0 : i32
    return %c0_i32, %c0_i32_0 : i32, i32
  }
  func.func @transform_3(%arg0: i32) -> (i32, i32) {
    %c0_i32 = arith.constant 0 : i32
    %c0_i32_0 = arith.constant 0 : i32
    %c0_i32_1 = arith.constant 0 : i32
    return %c0_i32, %c0_i32_0 : i32, i32
  }
  func.func @transform_4(%arg0: i32) -> (i32, i32) {
    %c0_i32 = arith.constant 0 : i32
    %c0_i32_0 = arith.constant 0 : i32
    %c0_i32_1 = arith.constant 0 : i32
    return %c0_i32, %c0_i32_0 : i32, i32
  }
  func.func @transform_5(%arg0: i32) -> (i32, i32) {
    %c0_i32 = arith.constant 0 : i32
    %c0_i32_0 = arith.constant 0 : i32
    return %arg0, %c0_i32 : i32, i32
  }
}

</mosaic_0001>

<llo_original>
// kernel: tpu_custom_call.1
$region0: #{tpu_custom_call.1}
  #allocation0 [shape = 'u32[]', space=smem, size = 0x4, offset = 0x4, fixed_abs, tag = 'smem constant byte address 0x4 - core index']
  #allocation1 [shape = 'u32[144,128]{1,0:T(1,128)}', space=vmem, size = 0x12000, scoped, tag = 'internal scratch']
  %s0 = inlined_call_operand.vmem [shape: f32[16,256], index: 0, kind: input, shape index: {}]
  %s1 = inlined_call_operand.hbm [shape: bf16[16,48], index: 1, kind: input, shape index: {}]
  %s2 = inlined_call_operand.vmem [shape: bf16[16,48], index: 2, kind: input, shape index: {}]
  %s3 = inlined_call_operand.vmem [shape: f32[16,1], index: 3, kind: input, shape index: {}]
  %s4 = inlined_call_operand.vmem [shape: f32[16,1], index: 4, kind: input, shape index: {}]
  %s5 = inlined_call_operand.hbm [shape: f32[16,256], index: 5, kind: output, shape index: {}]
  %s6 = sld [smem:[#allocation0]]
  $region34: #{tpu_custom_call.1} parent=0
    _
  %s8 = ssub.s32 1, %s6
  %s9 = scalar_select 0, %s8, %s6
  $region1: #{tpu_custom_call.1} parent=0
    #allocation2 [shape = 'u8[4096]{0}', space=vmem, size = 0x1000, scoped, tag = 'input window, operand 1, single buffered']
    #allocation3 [shape = 's32[1]{0}', space=sflag, size = 0x4, scoped, tag = 'scoped memory for tpu_custom_call.1']
    #allocation4 [shape = 's32[1]{0}', space=sflag, size = 0x4, scoped, tag = 'scoped memory for tpu_custom_call.1']
    #allocation5 [shape = 'u8[16384]{0}', space=vmem, size = 0x4000, scoped, tag = 'output window, operand 0, single buffered']
    %10 = vsyncpa [#allocation3], 0
    %11 = vsyncpa [#allocation4], 0
    // Predicated region
    $region2: #{tpu_custom_call.1} parent=1 // pred_check
      _
    $region3: #{tpu_custom_call.1} parent=1 // pred_check_branch
      %13 = sbr.rel (0) target = $region5
    $region4: #{tpu_custom_call.1} parent=1 // pred_region
      _
    $region5: #{tpu_custom_call.1} parent=1 // pred_fallthru
      _
    // Predicated region
    $region6: #{tpu_custom_call.1} parent=1 // pred_check
      _
    $region7: #{tpu_custom_call.1} parent=1 // pred_check_branch
      %15 = sbr.rel (0) target = $region9
    $region8: #{tpu_custom_call.1} parent=1 // pred_region
      %s17 = ssub.s32 128, 128
      %18 = vsyncadd [#allocation3], %s17
      %s19 = sshll.u32 [#allocation2], 4
      %s20 = int_to_ptr.vmem [resolvable:$true] %s19
      %25 = dma.hbm_to_vmem [thread:$0]  %s1, 128, %s20, [#allocation3], 64, 64, 4
    $region9: #{tpu_custom_call.1} parent=1 // pred_fallthru
      _
    // Predicated region
    $region10: #{tpu_custom_call.1} parent=1 // pred_check
      _
    $region11: #{tpu_custom_call.1} parent=1 // pred_check_branch
      %27 = sbr.rel (0) target = $region13
    $region12: #{tpu_custom_call.1} parent=1 // pred_region
      _
    $region13: #{tpu_custom_call.1} parent=1 // pred_fallthru
      _
    // Predicated region
    $region14: #{tpu_custom_call.1} parent=1 // pred_check
      _
    $region15: #{tpu_custom_call.1} parent=1 // pred_check_branch
      %29 = sbr.rel (0) target = $region17
    $region16: #{tpu_custom_call.1} parent=1 // pred_region
      _
    $region17: #{tpu_custom_call.1} parent=1 // pred_fallthru
      _
    // Predicated region
    $region18: #{tpu_custom_call.1} parent=1 // pred_check
      _
    $region19: #{tpu_custom_call.1} parent=1 // pred_check_branch
      %31 = sbr.rel (0) target = $region21
    $region20: #{tpu_custom_call.1} parent=1 // pred_region
      _
    $region21: #{tpu_custom_call.1} parent=1 // pred_fallthru
      _
    // Predicated region
    $region22: #{tpu_custom_call.1} parent=1 // pred_check
      _
    $region23: #{tpu_custom_call.1} parent=1 // pred_check_branch
      %33 = sbr.rel (0) target = $region25
    $region24: #{tpu_custom_call.1} parent=1 // pred_region
      %34 = dma.done [#allocation3], 128
    $region25: #{tpu_custom_call.1} parent=1 // pred_fallthru
      _
    %v36 = vld [vmem:[%s0] sm:$0xff]
    %v37 = vld [vmem:[%s0 + $0x8] sm:$0xff]
    %v38 = vld [vmem:[%s0 + $0x10] sm:$0xff]
    %v39 = vld [vmem:[%s0 + $0x18] sm:$0xff]
    %v40 = vlaneseq
    %v41 = vand.u32 %v40, 127
    %v42 = vadd.s32 %v41, 128
    %vm43 = vcmp.eq.s32.totalorder %v41, 0
    %vm44 = vcmp.eq.s32.totalorder %v42, 0
    %vm45 = vcmp.eq.s32.totalorder %v41, 255
    %vm46 = vcmp.eq.s32.totalorder %v42, 255
    %47 = vrot.lane.b32.xlu0 %v36, 1
    %v48 = vpop.permute.xlu0 %47
    %49 = vrot.lane.b32.xlu0 %v38, 1
    %v50 = vpop.permute.xlu0 %49
    %51 = vrot.lane.b32.xlu0 %v37, 1
    %v52 = vpop.permute.xlu0 %51
    %53 = vrot.lane.b32.xlu0 %v39, 1
    %v54 = vpop.permute.xlu0 %53
    %vm55 = vcmp.lt.s32.totalorder %v41, 1
    %v56 = vsel %vm55, %v48, %v52
    %v57 = vsel %vm55, %v50, %v54
    %v58 = vsel %vm55, %v52, %v48
    %v59 = vsel %vm55, %v54, %v50
    %v60 = vsel %vm43, 0.0, %v58
    %v61 = vsel %vm44, 0.0, %v56
    %v62 = vsel %vm43, 0.0, %v59
    %v63 = vsel %vm44, 0.0, %v57
    %64 = vrot.lane.b32.xlu0 %v36, 127
    %v65 = vpop.permute.xlu0 %64
    %66 = vrot.lane.b32.xlu0 %v38, 127
    %v67 = vpop.permute.xlu0 %66
    %68 = vrot.lane.b32.xlu0 %v37, 127
    %v69 = vpop.permute.xlu0 %68
    %70 = vrot.lane.b32.xlu0 %v39, 127
    %v71 = vpop.permute.xlu0 %70
    %vm72 = vcmp.lt.s32.totalorder %v41, 127
    %v73 = vsel %vm72, %v65, %v69
    %v74 = vsel %vm72, %v67, %v71
    %v75 = vsel %vm72, %v69, %v65
    %v76 = vsel %vm72, %v71, %v67
    %v77 = vsel %vm45, 0.0, %v73
    %v78 = vsel %vm46, 0.0, %v75
    %v79 = vsel %vm45, 0.0, %v74
    %v80 = vsel %vm46, 0.0, %v76
    %v81 = vpack.c.bf16 %v62, %v60
    %v82 = vpack.c.bf16 %v63, %v61
    %v83 = vpack.c.bf16 %v38, %v36
    %v84 = vpack.c.bf16 %v39, %v37
    %v85 = vpack.c.bf16 %v79, %v77
    %v86 = vpack.c.bf16 %v80, %v78
    %v87 = vld [vmem:[#allocation2] sm:$0xf]
    %v88 = vld [vmem:[#allocation2 + $0x4] sm:$0xf]
    %v89 = vld [vmem:[%s3] sm:$0xff]
    %v90 = vld [vmem:[%s3 + $0x8] sm:$0xff]
    %92 = vset.pattern.permute.xlu0 0
    %93 = vperm.xlu0 %92, %v89
    %v94 = vpop.permute.xlu0 %93
    %97 = vset.pattern.permute.xlu0 0
    %98 = vperm.xlu0 %97, %v90
    %v99 = vpop.permute.xlu0 %98
    %v103 = vunpack.c.l.b16 %v87
    %v104 = vunpack.c.l.b16 %v88
    %v105 = vpack.c.b16 %v104, %v103
    %vm106 = vcmask 392192
    %v108 = vsel %vm106, %v105, 0
    %110 = vmatprep.subr.bf16.mxu0 %v82
    %111 = vmatpush1.bf16.msra.mxu0 %v81
    %112 = vmatprep.subr.bf16.mxu0 %v84
    %113 = vmatpush1.bf16.msra.mxu0 %v83
    %114 = vmatprep.subr.bf16.mxu0 %v86
    %115 = vmatpush1.bf16.msra.mxu0 %v85
    %116 = vmatprep.subr.bf16.mxu0 0
    %117 = vmatpush1.bf16.msra.mxu0 0
    %118 = vmatprep.subr.bf16.mxu0 0
    %119 = vmatpush1.bf16.msra.mxu0 0
    %120 = vmatprep.subr.bf16.mxu0 0
    %121 = vmatpush1.bf16.msra.mxu0 0
    %122 = vmatprep.subr.bf16.mxu0 0
    %123 = vmatpush1.bf16.msra.mxu0 0
    %124 = vmatprep.subr.bf16.mxu0 0
    %125 = vmatpush1.bf16.msra.mxu0 0
    %126 = vmatprep.subr.bf16.mxu0 0
    %127 = vmatpush1.bf16.msra.mxu0 0
    %128 = vmatprep.subr.bf16.mxu0 0
    %129 = vmatpush1.bf16.msra.mxu0 0
    %130 = vmatprep.subr.bf16.mxu0 0
    %131 = vmatpush1.bf16.msra.mxu0 0
    %132 = vmatprep.subr.bf16.mxu0 0
    %133 = vmatpush1.bf16.msra.mxu0 0
    %134 = vmatprep.subr.bf16.mxu0 0
    %135 = vmatpush1.bf16.msra.mxu0 0
    %136 = vmatprep.subr.bf16.mxu0 0
    %137 = vmatpush1.bf16.msra.mxu0 0
    %138 = vmatprep.subr.bf16.mxu0 0
    %139 = vmatpush1.bf16.msra.mxu0 0
    %140 = vmatprep.subr.bf16.mxu0 0
    %141 = vmatpush1.bf16.msra.mxu0 0
    %142 = vmatprep.mubr.bf16.mxu0 0
    %143 = vmatmul.mubr.bf16.gmra.mrb[0].mxu0 %v108
    %v144 = vpop.f32.mrb[0].mxu0
    %v145 = vadd.f32 %v94, %v144
    %v146 = vpop.f32.mrb[0].mxu0
    %v147 = vadd.f32 %v94, %v146
    %v148 = vpop.f32.mrb[0].mxu0
    %v149 = vadd.f32 %v99, %v148
    %v150 = vpop.f32.mrb[0].mxu0
    %v151 = vadd.f32 %v99, %v150
    %152 = vdwg.mxu0
    %v153 = vmax.f32 %v145, 0.0
    %v154 = vmax.f32 %v147, 0.0
    %v155 = vmax.f32 %v149, 0.0
    %v156 = vmax.f32 %v151, 0.0
    %157 = vrot.lane.b32.xlu0 %v153, 1
    %v158 = vpop.permute.xlu0 %157
    %159 = vrot.lane.b32.xlu0 %v155, 1
    %v160 = vpop.permute.xlu0 %159
    %161 = vrot.lane.b32.xlu0 %v154, 1
    %v162 = vpop.permute.xlu0 %161
    %163 = vrot.lane.b32.xlu0 %v156, 1
    %v164 = vpop.permute.xlu0 %163
    %v165 = vsel %vm55, %v158, %v162
    %v166 = vsel %vm55, %v160, %v164
    %v167 = vsel %vm55, %v162, %v158
    %v168 = vsel %vm55, %v164, %v160
    %v169 = vsel %vm43, 0.0, %v167
    %v170 = vsel %vm44, 0.0, %v165
    %v171 = vsel %vm43, 0.0, %v168
    %v172 = vsel %vm44, 0.0, %v166
    %173 = vrot.lane.b32.xlu0 %v153, 127
    %v174 = vpop.permute.xlu0 %173
    %175 = vrot.lane.b32.xlu0 %v155, 127
    %v176 = vpop.permute.xlu0 %175
    %177 = vrot.lane.b32.xlu0 %v154, 127
    %v178 = vpop.permute.xlu0 %177
    %179 = vrot.lane.b32.xlu0 %v156, 127
    %v180 = vpop.permute.xlu0 %179
    %v181 = vsel %vm72, %v174, %v178
    %v182 = vsel %vm72, %v176, %v180
    %v183 = vsel %vm72, %v178, %v174
    %v184 = vsel %vm72, %v180, %v176
    %v185 = vsel %vm45, 0.0, %v181
    %v186 = vsel %vm46, 0.0, %v183
    %v187 = vsel %vm45, 0.0, %v182
    %v188 = vsel %vm46, 0.0, %v184
    %v189 = vpack.c.bf16 %v171, %v169
    %v190 = vpack.c.bf16 %v172, %v170
    %v191 = vpack.c.bf16 %v155, %v153
    %v192 = vpack.c.bf16 %v156, %v154
    %v193 = vpack.c.bf16 %v187, %v185
    %v194 = vpack.c.bf16 %v188, %v186
    %v195 = vld [vmem:[%s2] sm:$0xf]
    %v196 = vld [vmem:[%s2 + $0x4] sm:$0xf]
    %v197 = vld [vmem:[%s4] sm:$0xff]
    %v198 = vld [vmem:[%s4 + $0x8] sm:$0xff]
    %200 = vset.pattern.permute.xlu0 0
    %201 = vperm.xlu0 %200, %v197
    %v202 = vpop.permute.xlu0 %201
    %205 = vset.pattern.permute.xlu0 0
    %206 = vperm.xlu0 %205, %v198
    %v207 = vpop.permute.xlu0 %206
    %v211 = vunpack.c.l.b16 %v195
    %v212 = vunpack.c.l.b16 %v196
    %v213 = vpack.c.b16 %v212, %v211
    %v215 = vsel %vm106, %v213, 0
    %217 = vmatprep.subr.bf16.mxu0 %v190
    %218 = vmatpush1.bf16.msra.mxu0 %v189
    %219 = vmatprep.subr.bf16.mxu0 %v192
    %220 = vmatpush1.bf16.msra.mxu0 %v191
    %221 = vmatprep.subr.bf16.mxu0 %v194
    %222 = vmatpush1.bf16.msra.mxu0 %v193
    %223 = vmatprep.subr.bf16.mxu0 0
    %224 = vmatpush1.bf16.msra.mxu0 0
    %225 = vmatprep.subr.bf16.mxu0 0
    %226 = vmatpush1.bf16.msra.mxu0 0
    %227 = vmatprep.subr.bf16.mxu0 0
    %228 = vmatpush1.bf16.msra.mxu0 0
    %229 = vmatprep.subr.bf16.mxu0 0
    %230 = vmatpush1.bf16.msra.mxu0 0
    %231 = vmatprep.subr.bf16.mxu0 0
    %232 = vmatpush1.bf16.msra.mxu0 0
    %233 = vmatprep.subr.bf16.mxu0 0
    %234 = vmatpush1.bf16.msra.mxu0 0
    %235 = vmatprep.subr.bf16.mxu0 0
    %236 = vmatpush1.bf16.msra.mxu0 0
    %237 = vmatprep.subr.bf16.mxu0 0
    %238 = vmatpush1.bf16.msra.mxu0 0
    %239 = vmatprep.subr.bf16.mxu0 0
    %240 = vmatpush1.bf16.msra.mxu0 0
    %241 = vmatprep.subr.bf16.mxu0 0
    %242 = vmatpush1.bf16.msra.mxu0 0
    %243 = vmatprep.subr.bf16.mxu0 0
    %244 = vmatpush1.bf16.msra.mxu0 0
    %245 = vmatprep.subr.bf16.mxu0 0
    %246 = vmatpush1.bf16.msra.mxu0 0
    %247 = vmatprep.subr.bf16.mxu0 0
    %248 = vmatpush1.bf16.msra.mxu0 0
    %249 = vmatprep.mubr.bf16.mxu0 0
    %250 = vmatmul.mubr.bf16.gmra.mrb[0].mxu0 %v215
    %v251 = vpop.f32.mrb[0].mxu0
    %v252 = vadd.f32 %v202, %v251
    %v253 = vpop.f32.mrb[0].mxu0
    %v254 = vadd.f32 %v202, %v253
    %v255 = vpop.f32.mrb[0].mxu0
    %v256 = vadd.f32 %v207, %v255
    %v257 = vpop.f32.mrb[0].mxu0
    %v258 = vadd.f32 %v207, %v257
    %259 = vdwg.mxu0
    %v260 = vadd.f32 %v252, %v36
    %v261 = vadd.f32 %v254, %v37
    %v262 = vadd.f32 %v256, %v38
    %v263 = vadd.f32 %v258, %v39
    %v264 = vmax.f32 %v260, 0.0
    %v265 = vmax.f32 %v261, 0.0
    %v266 = vmax.f32 %v262, 0.0
    %v267 = vmax.f32 %v263, 0.0
    %268 = vst [vmem:[#allocation5] sm:$0xff] %v264
    %269 = vst [vmem:[#allocation5 + $0x8] sm:$0xff] %v265
    %270 = vst [vmem:[#allocation5 + $0x10] sm:$0xff] %v266
    %271 = vst [vmem:[#allocation5 + $0x18] sm:$0xff] %v267
    // Predicated region
    $region26: #{tpu_custom_call.1} parent=1 // pred_check
      _
    $region27: #{tpu_custom_call.1} parent=1 // pred_check_branch
      %273 = sbr.rel (0) target = $region29
    $region28: #{tpu_custom_call.1} parent=1 // pred_region
      %s275 = ssub.s32 512, 512
      %276 = vsyncadd [#allocation4], %s275
      %s277 = sshll.u32 [#allocation5], 4
      %s278 = int_to_ptr.vmem [resolvable:$true] %s277
      %283 = dma.vmem_to_hbm [thread:$0]  %s278, 512, %s5, [#allocation4], 256, 256, 16
    $region29: #{tpu_custom_call.1} parent=1 // pred_fallthru
      _
    // Predicated region
    $region30: #{tpu_custom_call.1} parent=1 // pred_check
      _
    $region31: #{tpu_custom_call.1} parent=1 // pred_check_branch
      %285 = sbr.rel (0) target = $region33
    $region32: #{tpu_custom_call.1} parent=1 // pred_region
      %286 = dma.done [#allocation4], 512
    $region33: #{tpu_custom_call.1} parent=1 // pred_fallthru
      _
    %287 = vsyncpa [#allocation3], 1
    %288 = vsyncpa [#allocation4], 1

</llo_original>
